<compile_context>
chip_gen: v5e
topology: v5e:2x2
jax: 0.10.0
libtpu: 0.0.40
codegen_flags: <defaults>
</compile_context>

<pallas_src>
import jax
import jax.numpy as jnp
from jax import lax
from jax.experimental import pallas as pl
from jax.experimental.pallas import tpu as pltpu

LANES = 128


# --------------------------------------------------------------------------
# Shared cell math (VMEM-resident tiles / vreg values)
# --------------------------------------------------------------------------
def _cell_step(x, h, c, w_x_ref, w_h_ref, b_ref):
    """One LSTMCell update. Gate columns are pre-reordered to [i|f|o|g]."""
    H = h.shape[1]
    wdt = w_x_ref.dtype
    gates = (jnp.dot(x.astype(wdt), w_x_ref[...],
                     preferred_element_type=jnp.float32)
             + jnp.dot(h.astype(wdt), w_h_ref[...],
                       preferred_element_type=jnp.float32)
             + b_ref[...])                                     # (B, 4H) f32

    sig = jax.nn.sigmoid(gates[:, :3 * H])                     # [i|f|o] slab
    g_g = jnp.tanh(gates[:, 3 * H:])                           # [g] slab
    i_g = sig[:, 0 * H:1 * H]
    f_g = sig[:, 1 * H:2 * H]
    o_g = sig[:, 2 * H:3 * H]

    c_new = f_g * c + i_g * g_g
    h_new = o_g * jnp.tanh(c_new)
    return h_new, c_new


# --------------------------------------------------------------------------
# Kernels
# --------------------------------------------------------------------------
def lstm_step_kernel(x_ref, h_ref, c_ref, w_x_ref, w_h_ref, b_ref,
                     w_o_ref, b_o_ref, out_ref, h_out_ref, c_out_ref):
    """Single LSTMCell step + readout (== one module.forward call)."""
    h_new, c_new = _cell_step(x_ref[...], h_ref[...], c_ref[...],
                              w_x_ref, w_h_ref, b_ref)
    h_out_ref[...] = h_new
    c_out_ref[...] = c_new
    # Lane-dense (B, 128) store; padded lanes hold b_o, sliced off by wrapper.
    out_ref[...] = (jnp.dot(h_new.astype(w_o_ref.dtype), w_o_ref[...],
                            preferred_element_type=jnp.float32)
                    + b_o_ref[0, 0])


def lstm_seq_kernel(x_ref, h0_ref, c0_ref, w_x_ref, w_h_ref, b_ref,
                    w_o_ref, b_o_ref, out_ref, h_out_ref, c_out_ref, h_buf):
    """T fused timesteps in ONE kernel invocation (no per-step grid revolve).

    h/c are carried as fori_loop values; every h_t is stashed into VMEM
    scratch and the readout runs as a single batched matmul after the loop.
    """
    T = x_ref.shape[0]

    def body(t, carry):
        h, c = carry
        h_new, c_new = _cell_step(x_ref[t], h, c, w_x_ref, w_h_ref, b_ref)
        h_buf[t] = h_new                       # stash for batched readout
        return h_new, c_new

    h_T, c_T = lax.fori_loop(0, T, body, (h0_ref[...], c0_ref[...]),
                             unroll=True)
    h_out_ref[...] = h_T
    c_out_ref[...] = c_T

    # Batched readout off the recurrent path: (T*B, H) @ (H, OP) fills the MXU
    # and produces one lane-dense output slab.
    T_, B, H = h_buf.shape
    OP = w_o_ref.shape[1]
    h_all = h_buf[...].reshape(T_ * B, H)
    out = (jnp.dot(h_all.astype(w_o_ref.dtype), w_o_ref[...],
                   preferred_element_type=jnp.float32)
           + b_o_ref[0, 0])
    out_ref[...] = out.reshape(T_, B, OP)


# --------------------------------------------------------------------------
# Parameter packing (done ONCE, not per forward call)
# --------------------------------------------------------------------------
def _reorder_ifog(w4h):
    """PyTorch gate order along axis 0 is [i|f|g|o]; reorder to [i|f|o|g]."""
    i, f, g, o = jnp.split(w4h, 4, axis=0)
    return jnp.concatenate([i, f, o, g], axis=0)


def pack_params(w_ih, w_hh, b_ih, b_hh, w_o, b_o, *,
                weight_dtype=jnp.float32):
    """Pre-transpose / reorder / pad the PyTorch-layout parameters."""
    four_h, input_size = w_ih.shape
    hidden_size = w_hh.shape[1]
    output_size = w_o.shape[0]
    out_pad = ((output_size + LANES - 1) // LANES) * LANES

    w_x_t = _reorder_ifog(w_ih).T.astype(weight_dtype)          # (I, 4H)
    w_h_t = _reorder_ifog(w_hh).T.astype(weight_dtype)          # (H, 4H)
    bias = _reorder_ifog(b_ih + b_hh).reshape(1, four_h)        # (1, 4H) f32
    bias = bias.astype(jnp.float32)
    w_o_t_pad = jnp.zeros((hidden_size, out_pad), weight_dtype)
    w_o_t_pad = w_o_t_pad.at[:, :output_size].set(
        w_o.T.astype(weight_dtype))                             # (H, 128)
    b_o_sc = jnp.asarray(b_o, jnp.float32).reshape(1, 1)        # SMEM scalar

    return dict(w_x_t=w_x_t, w_h_t=w_h_t, bias=bias,
                w_o_t_pad=w_o_t_pad, b_o=b_o_sc,
                input_size=input_size, hidden_size=hidden_size,
                output_size=output_size, out_pad=out_pad)


# --------------------------------------------------------------------------
# Wrappers
# --------------------------------------------------------------------------
_VMEM = pl.BlockSpec(memory_space=pltpu.MemorySpace.VMEM)
_SMEM = pl.BlockSpec(memory_space=pltpu.MemorySpace.SMEM)


def lstm_forward(x, h, c, params):
    """One module.forward() call. Returns (out, h_new, c_new).

    Prefer lstm_forward_sequence over calling this in a host-side loop
    (each call re-DMAs weights and pays full launch overhead).
    """
    B = x.shape[0]
    H = params["hidden_size"]
    OP = params["out_pad"]
    O = params["output_size"]

    out_pad, h_new, c_new = pl.pallas_call(
        lstm_step_kernel,
        out_shape=(
            jax.ShapeDtypeStruct((B, OP), jnp.float32),
            jax.ShapeDtypeStruct((B, H), jnp.float32),
            jax.ShapeDtypeStruct((B, H), jnp.float32),
        ),
        in_specs=[_VMEM] * 7 + [_SMEM],
        out_specs=(_VMEM, _VMEM, _VMEM),
    )(x, h, c, params["w_x_t"], params["w_h_t"], params["bias"],
      params["w_o_t_pad"], params["b_o"])
    return out_pad[:, :O], h_new, c_new


def lstm_forward_sequence(xs, h0, c0, params):
    """Equivalent to T successive module.forward() calls, fused in one kernel.

    Returns (outs (T,B,O), h_T, c_T).
    """
    T, B, I = xs.shape
    H = params["hidden_size"]
    OP = params["out_pad"]
    O = params["output_size"]

    outs_pad, h_T, c_T = pl.pallas_call(
        lstm_seq_kernel,
        out_shape=(
            jax.ShapeDtypeStruct((T, B, OP), jnp.float32),
            jax.ShapeDtypeStruct((B, H), jnp.float32),
            jax.ShapeDtypeStruct((B, H), jnp.float32),
        ),
        in_specs=[_VMEM] * 7 + [_SMEM],
        out_specs=(_VMEM, _VMEM, _VMEM),
        scratch_shapes=[pltpu.VMEM((T, B, H), jnp.float32)],   # h_t stash
    )(xs, h0, c0, params["w_x_t"], params["w_h_t"], params["bias"],
      params["w_o_t_pad"], params["b_o"])
    return outs_pad[:, :, :O], h_T, c_T


# --------------------------------------------------------------------------
# Init (mirrors the PyTorch module's __init__) and pure-JAX references
# --------------------------------------------------------------------------
def init_params(key, input_size, hidden_size, output_size):
    k1, k2, k3, k4, k5, k6 = jax.random.split(key, 6)
    gain = 5.0 / 3.0  # calculate_gain('tanh')

    def xavier_normal(k, shape):
        fan_out, fan_in = shape
        std = gain * jnp.sqrt(2.0 / (fan_in + fan_out))
        return std * jax.random.normal(k, shape, dtype=jnp.float32)

    w_ih = xavier_normal(k1, (4 * hidden_size, input_size))
    w_hh = xavier_normal(k2, (4 * hidden_size, hidden_size))
    b_ih = 0.1 * jax.random.normal(k3, (4 * hidden_size,), dtype=jnp.float32)
    b_hh = 0.1 * jax.random.normal(k4, (4 * hidden_size,), dtype=jnp.float32)
    w_o = jax.random.uniform(k5, (output_size, hidden_size), dtype=jnp.float32)
    b_o = jax.random.uniform(k6, (1,), dtype=jnp.float32)
    return w_ih, w_hh, b_ih, b_hh, w_o, b_o


def reference_forward(x, h, c, w_ih, w_hh, b_ih, b_hh, w_o, b_o):
    gates = x @ w_ih.T + b_ih + h @ w_hh.T + b_hh
    H = h.shape[1]
    i = jax.nn.sigmoid(gates[:, :H])
    f = jax.nn.sigmoid(gates[:, H:2 * H])
    g = jnp.tanh(gates[:, 2 * H:3 * H])
    o = jax.nn.sigmoid(gates[:, 3 * H:])
    c_new = f * c + i * g
    h_new = o * jnp.tanh(c_new)
    return h_new @ w_o.T + b_o, h_new, c_new


def reference_sequence(xs, h, c, w_ih, w_hh, b_ih, b_hh, w_o, b_o):
    outs = []
    for t in range(xs.shape[0]):
        o, h, c = reference_forward(xs[t], h, c, w_ih, w_hh, b_ih, b_hh,
                                    w_o, b_o)
        outs.append(o)
    return jnp.stack(outs), h, c


# --------------------------------------------------------------------------
if __name__ == "__main__":
    batch_size = 16       # module default batch_size
    input_size = 32
    hidden_size = 32
    output_size = 16
    seq_len = 8

    key = jax.random.PRNGKey(0)
    kp, kx, ks = jax.random.split(key, 3)
    w_ih, w_hh, b_ih, b_hh, w_o, b_o = init_params(
        kp, input_size, hidden_size, output_size)
    params = pack_params(w_ih, w_hh, b_ih, b_hh, w_o, b_o)  # one-time prep

    x = jax.random.normal(kx, (batch_size, input_size), dtype=jnp.float32)
    h0 = jnp.zeros((batch_size, hidden_size), dtype=jnp.float32)
    c0 = jnp.zeros((batch_size, hidden_size), dtype=jnp.float32)

    # Single forward() step (matches the PyTorch module exactly).
    out, h1, c1 = lstm_forward(x, h0, c0, params)
    jax.block_until_ready((out, h1, c1))

    out_r, h_r, c_r = reference_forward(x, h0, c0, w_ih, w_hh, b_ih, b_hh,
                                        w_o, b_o)
    assert jnp.allclose(out, out_r, atol=1e-4, rtol=1e-4)
    assert jnp.allclose(h1, h_r, atol=1e-4, rtol=1e-4)
    assert jnp.allclose(c1, c_r, atol=1e-4, rtol=1e-4)

    # Sequence-fused kernel: T forward() calls in one grid-less pallas_call.
    xs = jax.random.normal(ks, (seq_len, batch_size, input_size),
                           dtype=jnp.float32)
    outs, hT, cT = lstm_forward_sequence(xs, h0, c0, params)
    jax.block_until_ready((outs, hT, cT))

    outs_r, hT_r, cT_r = reference_sequence(xs, h0, c0, w_ih, w_hh, b_ih,
                                            b_hh, w_o, b_o)
    assert jnp.allclose(outs, outs_r, atol=1e-4, rtol=1e-4)
    assert jnp.allclose(hT, hT_r, atol=1e-4, rtol=1e-4)
    assert jnp.allclose(cT, cT_r, atol=1e-4, rtol=1e-4)

    print("KERNEL_OK")
</pallas_src>

<mosaic_0001>
module attributes {stable_mosaic.version = 11 : i64} {
  func.func @lstm_step_kernel(%arg0: memref<16x32xf32, #tpu.memory_space<vmem>>, %arg1: memref<16x32xf32, #tpu.memory_space<vmem>>, %arg2: memref<16x32xf32, #tpu.memory_space<vmem>>, %arg3: memref<32x128xf32, #tpu.memory_space<vmem>>, %arg4: memref<32x128xf32, #tpu.memory_space<vmem>>, %arg5: memref<1x128xf32, #tpu.memory_space<vmem>>, %arg6: memref<32x128xf32, #tpu.memory_space<vmem>>, %arg7: memref<1x1xf32, #tpu.memory_space<smem>>, %arg8: memref<16x128xf32, #tpu.memory_space<vmem>>, %arg9: memref<16x32xf32, #tpu.memory_space<vmem>>, %arg10: memref<16x32xf32, #tpu.memory_space<vmem>>) attributes {dimension_semantics = [], scalar_prefetch = 0 : i64, scratch_operands = 0 : i64, tpu.core_type = #tpu.core_type<tc>} {
    %c0 = arith.constant 0 : index
    %c0_0 = arith.constant 0 : index
    %0 = vector.load %arg0[%c0, %c0_0] : memref<16x32xf32, #tpu.memory_space<vmem>>, vector<16x32xf32>
    %c0_1 = arith.constant 0 : index
    %c0_2 = arith.constant 0 : index
    %1 = vector.load %arg1[%c0_1, %c0_2] : memref<16x32xf32, #tpu.memory_space<vmem>>, vector<16x32xf32>
    %c0_3 = arith.constant 0 : index
    %c0_4 = arith.constant 0 : index
    %2 = vector.load %arg2[%c0_3, %c0_4] : memref<16x32xf32, #tpu.memory_space<vmem>>, vector<16x32xf32>
    %c0_5 = arith.constant 0 : index
    %c0_6 = arith.constant 0 : index
    %3 = vector.load %arg3[%c0_5, %c0_6] : memref<32x128xf32, #tpu.memory_space<vmem>>, vector<32x128xf32>
    %cst = arith.constant dense<0.000000e+00> : vector<16x128xf32>
    %4 = tpu.matmul %0, %3, %cst {dimension_numbers = #tpu.dot_dimension_numbers<[1], [0], [0], [1], [0, 0, 1, 1], [], []>} : vector<16x32xf32>, vector<32x128xf32>, vector<16x128xf32> -> vector<16x128xf32>
    %c0_7 = arith.constant 0 : index
    %c0_8 = arith.constant 0 : index
    %5 = vector.load %arg4[%c0_7, %c0_8] : memref<32x128xf32, #tpu.memory_space<vmem>>, vector<32x128xf32>
    %cst_9 = arith.constant dense<0.000000e+00> : vector<16x128xf32>
    %6 = tpu.matmul %1, %5, %cst_9 {dimension_numbers = #tpu.dot_dimension_numbers<[1], [0], [0], [1], [0, 0, 1, 1], [], []>} : vector<16x32xf32>, vector<32x128xf32>, vector<16x128xf32> -> vector<16x128xf32>
    %7 = arith.addf %4, %6 : vector<16x128xf32>
    %c0_10 = arith.constant 0 : index
    %c0_11 = arith.constant 0 : index
    %8 = vector.load %arg5[%c0_10, %c0_11] : memref<1x128xf32, #tpu.memory_space<vmem>>, vector<1x128xf32>
    %9 = vector.broadcast %8 : vector<1x128xf32> to vector<16x128xf32>
    %10 = arith.addf %7, %9 : vector<16x128xf32>
    %11 = vector.extract_strided_slice %10 {offsets = [0, 0], sizes = [16, 96], strides = [1, 1]} : vector<16x128xf32> to vector<16x96xf32>
    %12 = arith.negf %11 : vector<16x96xf32>
    %13 = math.exp %12 : vector<16x96xf32>
    %cst_12 = arith.constant 1.000000e+00 : f32
    %14 = vector.broadcast %cst_12 : f32 to vector<16x96xf32>
    %15 = arith.addf %14, %13 : vector<16x96xf32>
    %16 = arith.divf %14, %15 : vector<16x96xf32>
    %17 = vector.extract_strided_slice %10 {offsets = [0, 96], sizes = [16, 32], strides = [1, 1]} : vector<16x128xf32> to vector<16x32xf32>
    %18 = math.tanh %17 : vector<16x32xf32>
    %19 = vector.extract_strided_slice %16 {offsets = [0, 0], sizes = [16, 32], strides = [1, 1]} : vector<16x96xf32> to vector<16x32xf32>
    %20 = vector.extract_strided_slice %16 {offsets = [0, 32], sizes = [16, 32], strides = [1, 1]} : vector<16x96xf32> to vector<16x32xf32>
    %21 = vector.extract_strided_slice %16 {offsets = [0, 64], sizes = [16, 32], strides = [1, 1]} : vector<16x96xf32> to vector<16x32xf32>
    %22 = arith.mulf %20, %2 : vector<16x32xf32>
    %23 = arith.mulf %19, %18 : vector<16x32xf32>
    %24 = arith.addf %22, %23 : vector<16x32xf32>
    %25 = math.tanh %24 : vector<16x32xf32>
    %26 = arith.mulf %21, %25 : vector<16x32xf32>
    %c0_13 = arith.constant 0 : index
    %c0_14 = arith.constant 0 : index
    %27 = vector.load %arg9[%c0_13, %c0_14] : memref<16x32xf32, #tpu.memory_space<vmem>>, vector<16x32xf32>
    tpu.vector_store %arg9[%c0_13, %c0_14], %26 {strides = array<i32>} : memref<16x32xf32, #tpu.memory_space<vmem>>, vector<16x32xf32>,
    %c0_15 = arith.constant 0 : index
    %c0_16 = arith.constant 0 : index
    %28 = vector.load %arg10[%c0_15, %c0_16] : memref<16x32xf32, #tpu.memory_space<vmem>>, vector<16x32xf32>
    tpu.vector_store %arg10[%c0_15, %c0_16], %24 {strides = array<i32>} : memref<16x32xf32, #tpu.memory_space<vmem>>, vector<16x32xf32>,
    %c0_17 = arith.constant 0 : index
    %c0_18 = arith.constant 0 : index
    %29 = vector.load %arg6[%c0_17, %c0_18] : memref<32x128xf32, #tpu.memory_space<vmem>>, vector<32x128xf32>
    %cst_19 = arith.constant dense<0.000000e+00> : vector<16x128xf32>
    %30 = tpu.matmul %26, %29, %cst_19 {dimension_numbers = #tpu.dot_dimension_numbers<[1], [0], [0], [1], [0, 0, 1, 1], [], []>} : vector<16x32xf32>, vector<32x128xf32>, vector<16x128xf32> -> vector<16x128xf32>
    %c0_20 = arith.constant 0 : index
    %c0_21 = arith.constant 0 : index
    %31 = memref.load %arg7[%c0_20, %c0_21] : memref<1x1xf32, #tpu.memory_space<smem>>
    %32 = vector.broadcast %31 : f32 to vector<16x128xf32>
    %33 = arith.addf %30, %32 : vector<16x128xf32>
    %c0_22 = arith.constant 0 : index
    %c0_23 = arith.constant 0 : index
    %34 = vector.load %arg8[%c0_22, %c0_23] : memref<16x128xf32, #tpu.memory_space<vmem>>, vector<16x128xf32>
    tpu.vector_store %arg8[%c0_22, %c0_23], %33 {strides = array<i32>} : memref<16x128xf32, #tpu.memory_space<vmem>>, vector<16x128xf32>,
    return
  }
}

</mosaic_0001>

<llo_original>
// kernel: tpu_custom_call.1
$region0: #{tpu_custom_call.1}
  #allocation0 [shape = 'u32[]', space=smem, size = 0x4, offset = 0x4, fixed_abs, tag = 'smem constant byte address 0x4 - core index']
  #allocation1 [shape = 'u32[72,128]{1,0:T(1,128)}', space=vmem, size = 0x9000, scoped, tag = 'internal scratch']
  #allocation2 [shape = 'f32[1,1]{1,0:T(1,128)S(6)}', space=smem, size = 0x200, scoped, tag = 'scoped memory for tpu_custom_call.1']
  %s0 = inlined_call_operand.hbm [shape: f32[16,32], index: 0, kind: input, shape index: {}]
  %s1 = inlined_call_operand.hbm [shape: f32[16,32], index: 1, kind: input, shape index: {}]
  %s2 = inlined_call_operand.hbm [shape: f32[16,32], index: 2, kind: input, shape index: {}]
  %s3 = inlined_call_operand.hbm [shape: f32[32,128], index: 3, kind: input, shape index: {}]
  %s4 = inlined_call_operand.hbm [shape: f32[32,128], index: 4, kind: input, shape index: {}]
  %s5 = inlined_call_operand.vmem [shape: f32[1,128], index: 5, kind: input, shape index: {}]
  %s6 = inlined_call_operand.hbm [shape: f32[32,128], index: 6, kind: input, shape index: {}]
  %s7 = inlined_call_operand.<no memory space> [shape: f32[1,1], index: 7, kind: input, shape index: {}]
  %s8 = inlined_call_operand.hbm [shape: f32[16,128], index: 8, kind: output, shape index: {0}]
  %s9 = inlined_call_operand.hbm [shape: f32[16,32], index: 9, kind: output, shape index: {1}]
  %s10 = inlined_call_operand.hbm [shape: f32[16,32], index: 10, kind: output, shape index: {2}]
  %11 = xla_tuple %s8, %s9, %s10
  %s12 = sld [smem:[#allocation0]]
  $region82: #{tpu_custom_call.1} parent=0
    _
  %s14 = ssub.s32 1, %s12
  %s15 = scalar_select 0, %s14, %s12
  %16 = sst [smem:[#allocation2]] %s7
  $region1: #{tpu_custom_call.1} parent=0
    #allocation3 [shape = 'u8[8192]{0}', space=vmem, size = 0x2000, scoped, tag = 'input window, operand 0, single buffered']
    #allocation4 [shape = 's32[1]{0}', space=sflag, size = 0x4, scoped, tag = 'scoped memory for tpu_custom_call.1']
    #allocation5 [shape = 's32[1]{0}', space=sflag, size = 0x4, scoped, tag = 'scoped memory for tpu_custom_call.1']
    #allocation6 [shape = 'u8[8192]{0}', space=vmem, size = 0x2000, scoped, tag = 'input window, operand 1, single buffered']
    #allocation7 [shape = 's32[1]{0}', space=sflag, size = 0x4, scoped, tag = 'scoped memory for tpu_custom_call.1']
    #allocation8 [shape = 'u8[8192]{0}', space=vmem, size = 0x2000, scoped, tag = 'input window, operand 2, single buffered']
    #allocation9 [shape = 'u8[16384]{0}', space=vmem, size = 0x4000, scoped, tag = 'input window, operand 3, single buffered']
    #allocation10 [shape = 's32[1]{0}', space=sflag, size = 0x4, scoped, tag = 'scoped memory for tpu_custom_call.1']
    #allocation11 [shape = 'u8[16384]{0}', space=vmem, size = 0x4000, scoped, tag = 'input window, operand 4, single buffered']
    #allocation12 [shape = 'u8[16384]{0}', space=vmem, size = 0x4000, scoped, tag = 'input window, operand 6, single buffered']
    #allocation13 [shape = 's32[1]{0}', space=sflag, size = 0x4, scoped, tag = 'scoped memory for tpu_custom_call.1']
    #allocation14 [shape = 'u8[8192]{0}', space=vmem, size = 0x2000, scoped, tag = 'output window, operand 0, single buffered']
    #allocation15 [shape = 'u8[8192]{0}', space=vmem, size = 0x2000, scoped, tag = 'output window, operand 1, single buffered']
    #allocation16 [shape = 's32[1]{0}', space=sflag, size = 0x4, scoped, tag = 'scoped memory for tpu_custom_call.1']
    #allocation17 [shape = 'u8[8192]{0}', space=vmem, size = 0x2000, scoped, tag = 'output window, operand 2, single buffered']
    %17 = vsyncpa [#allocation4], 0
    %18 = vsyncpa [#allocation7], 0
    %19 = vsyncpa [#allocation10], 0
    %20 = vsyncpa [#allocation13], 0
    %21 = vsyncpa [#allocation5], 0
    %22 = vsyncpa [#allocation16], 0
    // Predicated region
    $region2: #{tpu_custom_call.1} parent=1 // pred_check
      _
    $region3: #{tpu_custom_call.1} parent=1 // pred_check_branch
      %24 = sbr.rel (0) target = $region5
    $region4: #{tpu_custom_call.1} parent=1 // pred_region
      %26 = vsyncadd [#allocation4], 0
      %s27 = sshll.u32 %s0, 4
      %s28 = int_to_ptr.hbm [resolvable:$true] %s27
      %s29 = sshll.u32 [#allocation3], 4
      %s30 = int_to_ptr.vmem [resolvable:$true] %s29
      %35 = dma.hbm_to_vmem [thread:$0]  %s28, 256, %s30, [#allocation4], 128, 128, 8
    $region5: #{tpu_custom_call.1} parent=1 // pred_fallthru
      _
    // Predicated region
    $region6: #{tpu_custom_call.1} parent=1 // pred_check
      _
    $region7: #{tpu_custom_call.1} parent=1 // pred_check_branch
      %37 = sbr.rel (0) target = $region9
    $region8: #{tpu_custom_call.1} parent=1 // pred_region
      %39 = vsyncadd [#allocation7], 0
      %s40 = sshll.u32 %s1, 4
      %s41 = int_to_ptr.hbm [resolvable:$true] %s40
      %s42 = sshll.u32 [#allocation6], 4
      %s43 = int_to_ptr.vmem [resolvable:$true] %s42
      %48 = dma.hbm_to_vmem [thread:$0]  %s41, 256, %s43, [#allocation7], 128, 128, 8
    $region9: #{tpu_custom_call.1} parent=1 // pred_fallthru
      _
    // Predicated region
    $region10: #{tpu_custom_call.1} parent=1 // pred_check
      _
    $region11: #{tpu_custom_call.1} parent=1 // pred_check_branch
      %50 = sbr.rel (0) target = $region13
    $region12: #{tpu_custom_call.1} parent=1 // pred_region
      %52 = vsyncadd [#allocation7], 0
      %s53 = sshll.u32 %s2, 4
      %s54 = int_to_ptr.hbm [resolvable:$true] %s53
      %s55 = sshll.u32 [#allocation8], 4
      %s56 = int_to_ptr.vmem [resolvable:$true] %s55
      %61 = dma.hbm_to_vmem [thread:$0]  %s54, 256, %s56, [#allocation7], 128, 128, 8
    $region13: #{tpu_custom_call.1} parent=1 // pred_fallthru
      _
    // Predicated region
    $region14: #{tpu_custom_call.1} parent=1 // pred_check
      _
    $region15: #{tpu_custom_call.1} parent=1 // pred_check_branch
      %63 = sbr.rel (0) target = $region17
    $region16: #{tpu_custom_call.1} parent=1 // pred_region
      %65 = vsyncadd [#allocation10], 0
      %s66 = sshll.u32 %s3, 4
      %s67 = int_to_ptr.hbm [resolvable:$true] %s66
      %s68 = sshll.u32 [#allocation9], 4
      %s69 = int_to_ptr.vmem [resolvable:$true] %s68
      %74 = dma.hbm_to_vmem [thread:$0]  %s67, 512, %s69, [#allocation10], 128, 128, 8
    $region17: #{tpu_custom_call.1} parent=1 // pred_fallthru
      _
    // Predicated region
    $region18: #{tpu_custom_call.1} parent=1 // pred_check
      _
    $region19: #{tpu_custom_call.1} parent=1 // pred_check_branch
      %76 = sbr.rel (0) target = $region21
    $region20: #{tpu_custom_call.1} parent=1 // pred_region
      %78 = vsyncadd [#allocation10], 0
      %s79 = sshll.u32 %s4, 4
      %s80 = int_to_ptr.hbm [resolvable:$true] %s79
      %s81 = sshll.u32 [#allocation11], 4
      %s82 = int_to_ptr.vmem [resolvable:$true] %s81
      %87 = dma.hbm_to_vmem [thread:$0]  %s80, 512, %s82, [#allocation10], 128, 128, 8
    $region21: #{tpu_custom_call.1} parent=1 // pred_fallthru
      _
    // Predicated region
    $region22: #{tpu_custom_call.1} parent=1 // pred_check
      _
    $region23: #{tpu_custom_call.1} parent=1 // pred_check_branch
      %89 = sbr.rel (0) target = $region25
    $region24: #{tpu_custom_call.1} parent=1 // pred_region
      _
    $region25: #{tpu_custom_call.1} parent=1 // pred_fallthru
      _
    // Predicated region
    $region26: #{tpu_custom_call.1} parent=1 // pred_check
      _
    $region27: #{tpu_custom_call.1} parent=1 // pred_check_branch
      %91 = sbr.rel (0) target = $region29
    $region28: #{tpu_custom_call.1} parent=1 // pred_region
      %93 = vsyncadd [#allocation13], 0
      %s94 = sshll.u32 %s6, 4
      %s95 = int_to_ptr.hbm [resolvable:$true] %s94
      %s96 = sshll.u32 [#allocation12], 4
      %s97 = int_to_ptr.vmem [resolvable:$true] %s96
      %102 = dma.hbm_to_vmem [thread:$0]  %s95, 512, %s97, [#allocation13], 128, 128, 8
    $region29: #{tpu_custom_call.1} parent=1 // pred_fallthru
      _
    // Predicated region
    $region30: #{tpu_custom_call.1} parent=1 // pred_check
      _
    $region31: #{tpu_custom_call.1} parent=1 // pred_check_branch
      %104 = sbr.rel (0) target = $region33
    $region32: #{tpu_custom_call.1} parent=1 // pred_region
      _
    $region33: #{tpu_custom_call.1} parent=1 // pred_fallthru
      _
    // Predicated region
    $region34: #{tpu_custom_call.1} parent=1 // pred_check
      _
    $region35: #{tpu_custom_call.1} parent=1 // pred_check_branch
      %106 = sbr.rel (0) target = $region37
    $region36: #{tpu_custom_call.1} parent=1 // pred_region
      %108 = dma.done [#allocation4], 256
    $region37: #{tpu_custom_call.1} parent=1 // pred_fallthru
      _
    // Predicated region
    $region38: #{tpu_custom_call.1} parent=1 // pred_check
      _
    $region39: #{tpu_custom_call.1} parent=1 // pred_check_branch
      %110 = sbr.rel (0) target = $region41
    $region40: #{tpu_custom_call.1} parent=1 // pred_region
      %112 = dma.done [#allocation7], 256
    $region41: #{tpu_custom_call.1} parent=1 // pred_fallthru
      _
    // Predicated region
    $region42: #{tpu_custom_call.1} parent=1 // pred_check
      _
    $region43: #{tpu_custom_call.1} parent=1 // pred_check_branch
      %114 = sbr.rel (0) target = $region45
    $region44: #{tpu_custom_call.1} parent=1 // pred_region
      %116 = dma.done [#allocation7], 256
    $region45: #{tpu_custom_call.1} parent=1 // pred_fallthru
      _
    // Predicated region
    $region46: #{tpu_custom_call.1} parent=1 // pred_check
      _
    $region47: #{tpu_custom_call.1} parent=1 // pred_check_branch
      %118 = sbr.rel (0) target = $region49
    $region48: #{tpu_custom_call.1} parent=1 // pred_region
      %120 = dma.done [#allocation10], 512
    $region49: #{tpu_custom_call.1} parent=1 // pred_fallthru
      _
    // Predicated region
    $region50: #{tpu_custom_call.1} parent=1 // pred_check
      _
    $region51: #{tpu_custom_call.1} parent=1 // pred_check_branch
      %122 = sbr.rel (0) target = $region53
    $region52: #{tpu_custom_call.1} parent=1 // pred_region
      %124 = dma.done [#allocation10], 512
    $region53: #{tpu_custom_call.1} parent=1 // pred_fallthru
      _
    // Predicated region
    $region54: #{tpu_custom_call.1} parent=1 // pred_check
      _
    $region55: #{tpu_custom_call.1} parent=1 // pred_check_branch
      %126 = sbr.rel (0) target = $region57
    $region56: #{tpu_custom_call.1} parent=1 // pred_region
      %128 = dma.done [#allocation13], 512
    $region57: #{tpu_custom_call.1} parent=1 // pred_fallthru
      _
    %v129 = vld [vmem:[#allocation3] sm:$0xff]
    %v130 = vld [vmem:[#allocation3 + $0x8] sm:$0xff]
    %v131 = vld [vmem:[#allocation6] sm:$0xff]
    %v132 = vld [vmem:[#allocation6 + $0x8] sm:$0xff]
    %v133 = vld [vmem:[#allocation8] sm:$0xff]
    %v134 = vld [vmem:[#allocation8 + $0x8] sm:$0xff]
    %v135 = vld [vmem:[#allocation9] sm:$0xff]
    %v136 = vld [vmem:[#allocation9 + $0x8] sm:$0xff]
    %v137 = vld [vmem:[#allocation9 + $0x10] sm:$0xff]
    %v138 = vld [vmem:[#allocation9 + $0x18] sm:$0xff]
    %v139 = vld [vmem:[#allocation11] sm:$0xff]
    %v140 = vld [vmem:[#allocation11 + $0x8] sm:$0xff]
    %v141 = vld [vmem:[#allocation11 + $0x10] sm:$0xff]
    %v142 = vld [vmem:[#allocation11 + $0x18] sm:$0xff]
    %vm143 = vcmask 261120
    %v145 = vsel %vm143, %v131, 0
    %v148 = vsel %vm143, %v132, 0
    %150 = vmatpush.msra.mxu0 0.0
    %151 = vmatpush.msra.mxu0 0.0
    %152 = vmatpush.msra.mxu0 0.0
    %153 = vmatpush.msra.mxu0 0.0
    %154 = vmatpush.msra.mxu0 0.0
    %155 = vmatpush.msra.mxu0 0.0
    %156 = vmatpush.msra.mxu0 0.0
    %157 = vmatpush.msra.mxu0 0.0
    %158 = vmatpush.msra.mxu0 0.0
    %159 = vmatpush.msra.mxu0 0.0
    %160 = vmatpush.msra.mxu0 0.0
    %161 = vmatpush.msra.mxu0 0.0
    %162 = vmatpush.msra.mxu0 %v142
    %163 = vmatpush.msra.mxu0 %v141
    %164 = vmatpush.msra.mxu0 %v140
    %165 = vmatpush.msra.mxu0 %v139
    %166 = vmatmul.f32.gmra.mxu0 %v145
    %v167 = vpop.f32.mrf.mxu0
    %v168 = vadd.f32 0.0, %v167
    %169 = vmatmul.f32.gmra.mxu0 %v148
    %v170 = vpop.f32.mrf.mxu0
    %v171 = vadd.f32 0.0, %v170
    %172 = vdwg.mxu0
    %v174 = vsel %vm143, %v129, 0
    %v177 = vsel %vm143, %v130, 0
    %179 = vmatpush.msra.mxu0 0.0
    %180 = vmatpush.msra.mxu0 0.0
    %181 = vmatpush.msra.mxu0 0.0
    %182 = vmatpush.msra.mxu0 0.0
    %183 = vmatpush.msra.mxu0 0.0
    %184 = vmatpush.msra.mxu0 0.0
    %185 = vmatpush.msra.mxu0 0.0
    %186 = vmatpush.msra.mxu0 0.0
    %187 = vmatpush.msra.mxu0 0.0
    %188 = vmatpush.msra.mxu0 0.0
    %189 = vmatpush.msra.mxu0 0.0
    %190 = vmatpush.msra.mxu0 0.0
    %191 = vmatpush.msra.mxu0 %v138
    %192 = vmatpush.msra.mxu0 %v137
    %193 = vmatpush.msra.mxu0 %v136
    %194 = vmatpush.msra.mxu0 %v135
    %195 = vmatmul.f32.gmra.mxu0 %v174
    %v196 = vpop.f32.mrf.mxu0
    %v197 = vadd.f32 %v168, %v196
    %198 = vmatmul.f32.gmra.mxu0 %v177
    %v199 = vpop.f32.mrf.mxu0
    %v200 = vadd.f32 %v171, %v199
    %201 = vdwg.mxu0
    %v202 = vld [vmem:[%s5] sm:$0x1]
    %v204 = vperm.slane %v202, 0
    %v206 = vadd.f32 %v197, %v204
    %v207 = vadd.f32 %v200, %v204
    %v208 = vxor.u32 %v206, 2147483648
    %v209 = vxor.u32 %v207, 2147483648
    %v210 = vmul.f32 %v208, 1.442695
    %v211 = vpow.pop %v210
    %v212 = vmul.f32 %v209, 1.442695
    %v213 = vpow.pop %v212
    %v214 = vadd.f32 %v211, 1.0
    %v215 = vadd.f32 %v213, 1.0
    %v216 = vrcp.pop %v214
    %v217 = vmul.f32 %v214, %v216
    %v218 = vsub.f32 1.0, %v217
    %v219 = vmul.f32 %v216, %v218
    %v220 = vadd.f32 %v216, %v219
    %vm221 = vweird.f32 %v214
    %vm222 = vweird.f32 %v216
    %vm223 = vmor %vm221, %vm222
    %v224 = vsel %vm223, %v216, %v220
    %v225 = vand.u32 2147483647, %v214
    %vm226 = vcmp.eq.f32.partialorder %v225, 8.507059e+37
    %v227 = vand.u32 %v214, 2147483648
    %v228 = vor.u32 1.1754944e-38, %v227
    %v229 = vsel %vm226, %v228, %v224
    %v230 = vmul.f32 1.0, %v229
    %v231 = vrcp.pop %v215
    %v232 = vmul.f32 %v215, %v231
    %v233 = vsub.f32 1.0, %v232
    %v234 = vmul.f32 %v231, %v233
    %v235 = vadd.f32 %v231, %v234
    %vm236 = vweird.f32 %v215
    %vm237 = vweird.f32 %v231
    %vm238 = vmor %vm236, %vm237
    %v239 = vsel %vm238, %v231, %v235
    %v240 = vand.u32 2147483647, %v215
    %vm241 = vcmp.eq.f32.partialorder %v240, 8.507059e+37
    %v242 = vand.u32 %v215, 2147483648
    %v243 = vor.u32 1.1754944e-38, %v242
    %v244 = vsel %vm241, %v243, %v239
    %v245 = vmul.f32 1.0, %v244
    %v246 = vtanh.pop %v206
    %v247 = vtanh.pop %v207
    %250 = vrot.lane.b32.xlu0 %v133, 32
    %v251 = vpop.permute.xlu0 %250
    %252 = vrot.lane.b32.xlu0 %v134, 32
    %v253 = vpop.permute.xlu0 %252
    %v256 = vmul.f32 %v230, %v251
    %v257 = vmul.f32 %v245, %v253
    %260 = vrot.lane.b32.xlu0 %v246, 32
    %v261 = vpop.permute.xlu0 %260
    %262 = vrot.lane.b32.xlu0 %v247, 32
    %v263 = vpop.permute.xlu0 %262
    %v266 = vmul.f32 %v230, %v261
    %v267 = vmul.f32 %v245, %v263
    %270 = vrot.lane.b32.xlu0 %v266, 32
    %v271 = vpop.permute.xlu0 %270
    %272 = vrot.lane.b32.xlu0 %v267, 32
    %v273 = vpop.permute.xlu0 %272
    %v276 = vadd.f32 %v256, %v271
    %v277 = vadd.f32 %v257, %v273
    %v278 = vtanh.pop %v276
    %v279 = vtanh.pop %v277
    %282 = vrot.lane.b32.xlu0 %v278, 32
    %v283 = vpop.permute.xlu0 %282
    %284 = vrot.lane.b32.xlu0 %v279, 32
    %v285 = vpop.permute.xlu0 %284
    %v288 = vmul.f32 %v230, %v283
    %v289 = vmul.f32 %v245, %v285
    %292 = vrot.lane.b32.xlu0 %v288, 64
    %v293 = vpop.permute.xlu0 %292
    %294 = vrot.lane.b32.xlu0 %v289, 64
    %v295 = vpop.permute.xlu0 %294
    %298 = vst.msk [vmem:[#allocation15] sm:$0xff] %vm143, %v293
    %299 = vst.msk [vmem:[#allocation15 + $0x8] sm:$0xff] %vm143, %v295
    %302 = vrot.lane.b32.xlu0 %v276, 96
    %v303 = vpop.permute.xlu0 %302
    %304 = vrot.lane.b32.xlu0 %v277, 96
    %v305 = vpop.permute.xlu0 %304
    %308 = vst.msk [vmem:[#allocation17] sm:$0xff] %vm143, %v303
    %309 = vst.msk [vmem:[#allocation17 + $0x8] sm:$0xff] %vm143, %v305
    %v310 = vld [vmem:[#allocation12] sm:$0xff]
    %v311 = vld [vmem:[#allocation12 + $0x8] sm:$0xff]
    %v312 = vld [vmem:[#allocation12 + $0x10] sm:$0xff]
    %v313 = vld [vmem:[#allocation12 + $0x18] sm:$0xff]
    %s314 = sld [smem:[#allocation2]]
    %v315 = vstv %s314
    %v316 = vsel %vm143, %v293, 0
    %v318 = vsel %vm143, %v295, 0
    %320 = vmatpush.msra.mxu0 0.0
    %321 = vmatpush.msra.mxu0 0.0
    %322 = vmatpush.msra.mxu0 0.0
    %323 = vmatpush.msra.mxu0 0.0
    %324 = vmatpush.msra.mxu0 0.0
    %325 = vmatpush.msra.mxu0 0.0
    %326 = vmatpush.msra.mxu0 0.0
    %327 = vmatpush.msra.mxu0 0.0
    %328 = vmatpush.msra.mxu0 0.0
    %329 = vmatpush.msra.mxu0 0.0
    %330 = vmatpush.msra.mxu0 0.0
    %331 = vmatpush.msra.mxu0 0.0
    %332 = vmatpush.msra.mxu0 %v313
    %333 = vmatpush.msra.mxu0 %v312
    %334 = vmatpush.msra.mxu0 %v311
    %335 = vmatpush.msra.mxu0 %v310
    %336 = vmatmul.f32.gmra.mxu0 %v316
    %v337 = vpop.f32.mrf.mxu0
    %v338 = vadd.f32 %v315, %v337
    %339 = vmatmul.f32.gmra.mxu0 %v318
    %v340 = vpop.f32.mrf.mxu0
    %v341 = vadd.f32 %v315, %v340
    %342 = vdwg.mxu0
    %343 = vst [vmem:[#allocation14] sm:$0xff] %v338
    %344 = vst [vmem:[#allocation14 + $0x8] sm:$0xff] %v341
    // Predicated region
    $region58: #{tpu_custom_call.1} parent=1 // pred_check
      _
    $region59: #{tpu_custom_call.1} parent=1 // pred_check_branch
      %346 = sbr.rel (0) target = $region61
    $region60: #{tpu_custom_call.1} parent=1 // pred_region
      %348 = vsyncadd [#allocation5], 0
      %s349 = sshll.u32 [#allocation14], 4
      %s350 = int_to_ptr.vmem [resolvable:$true] %s349
      %s351 = sshll.u32 %s8, 4
      %s352 = int_to_ptr.hbm [resolvable:$true] %s351
      %357 = dma.vmem_to_hbm [thread:$0]  %s350, 256, %s352, [#allocation5], 128, 128, 8
    $region61: #{tpu_custom_call.1} parent=1 // pred_fallthru
      _
    // Predicated region
    $region62: #{tpu_custom_call.1} parent=1 // pred_check
      _
    $region63: #{tpu_custom_call.1} parent=1 // pred_check_branch
      %359 = sbr.rel (0) target = $region65
    $region64: #{tpu_custom_call.1} parent=1 // pred_region
      %361 = vsyncadd [#allocation16], 0
      %s362 = sshll.u32 [#allocation15], 4
      %s363 = int_to_ptr.vmem [resolvable:$true] %s362
      %s364 = sshll.u32 %s9, 4
      %s365 = int_to_ptr.hbm [resolvable:$true] %s364
      %370 = dma.vmem_to_hbm [thread:$0]  %s363, 256, %s365, [#allocation16], 128, 128, 8
    $region65: #{tpu_custom_call.1} parent=1 // pred_fallthru
      _
    // Predicated region
    $region66: #{tpu_custom_call.1} parent=1 // pred_check
      _
    $region67: #{tpu_custom_call.1} parent=1 // pred_check_branch
      %372 = sbr.rel (0) target = $region69
    $region68: #{tpu_custom_call.1} parent=1 // pred_region
      %374 = vsyncadd [#allocation16], 0
      %s375 = sshll.u32 [#allocation17], 4
      %s376 = int_to_ptr.vmem [resolvable:$true] %s375
      %s377 = sshll.u32 %s10, 4
      %s378 = int_to_ptr.hbm [resolvable:$true] %s377
      %383 = dma.vmem_to_hbm [thread:$0]  %s376, 256, %s378, [#allocation16], 128, 128, 8
    $region69: #{tpu_custom_call.1} parent=1 // pred_fallthru
      _
    // Predicated region
    $region70: #{tpu_custom_call.1} parent=1 // pred_check
      _
    $region71: #{tpu_custom_call.1} parent=1 // pred_check_branch
      %385 = sbr.rel (0) target = $region73
    $region72: #{tpu_custom_call.1} parent=1 // pred_region
      %387 = dma.done [#allocation5], 256
    $region73: #{tpu_custom_call.1} parent=1 // pred_fallthru
      _
    // Predicated region
    $region74: #{tpu_custom_call.1} parent=1 // pred_check
      _
    $region75: #{tpu_custom_call.1} parent=1 // pred_check_branch
      %389 = sbr.rel (0) target = $region77
    $region76: #{tpu_custom_call.1} parent=1 // pred_region
      %391 = dma.done [#allocation16], 256
    $region77: #{tpu_custom_call.1} parent=1 // pred_fallthru
      _
    // Predicated region
    $region78: #{tpu_custom_call.1} parent=1 // pred_check
      _
    $region79: #{tpu_custom_call.1} parent=1 // pred_check_branch
      %393 = sbr.rel (0) target = $region81
    $region80: #{tpu_custom_call.1} parent=1 // pred_region
      %395 = dma.done [#allocation16], 256
    $region81: #{tpu_custom_call.1} parent=1 // pred_fallthru
      _
    %396 = vsyncpa [#allocation4], 1
    %397 = vsyncpa [#allocation7], 1
    %398 = vsyncpa [#allocation10], 1
    %399 = vsyncpa [#allocation13], 1
    %400 = vsyncpa [#allocation5], 1
    %401 = vsyncpa [#allocation16], 1

</llo_original>
